<compile_context>
chip_gen: v7x
topology: tpu7x:2x2x1
jax: 0.10.0
libtpu: 0.0.40
codegen_flags: <defaults>
</compile_context>

<pallas_src>
import functools

import jax
import jax.numpy as jnp
from jax import lax
from jax.experimental import pallas as pl
from jax.experimental.pallas import tpu as pltpu


_LANE = 128
_TILE_M = 128            # Gram row tile for the row-tiled (large-M) path
_ROW_TILED_MIN_M = 256   # switch to the 2-D (rows x K) grid at this many rows
_FALLBACK_VMEM = 64 * 1024 * 1024


def _round_up(x, m):
    return ((x + m - 1) // m) * m


def _mxu_dtype(dtype):
    # bf16 operands for the MXU (accumulation stays f32); keep low-precision
    # inputs as-is.
    return jnp.bfloat16 if dtype == jnp.float32 else dtype


def _vmem_budget():
    """Per-generation VMEM planning budget and Mosaic scoped limit.

    v5e/v6e (128 MiB physical): plan ~88 MiB, limit ~120 MiB.
    v7x     (64 MiB physical) : plan ~44 MiB, limit ~56 MiB.
    """
    try:
        cap = int(pltpu.get_tpu_info().vmem_capacity_bytes)
    except Exception:
        cap = _FALLBACK_VMEM          # conservative: fits every generation
    cap = max(cap, 32 * 1024 * 1024)
    plan = (cap * 11) // 16
    limit = cap - (8 << 20)
    return plan, limit


def _plan_tiles(m, k, itemsize):
    """Returns (mp, kp, tm, tk, row_tiled, vmem_limit_bytes)."""
    plan_bytes, limit_bytes = _vmem_budget()
    kp = _round_up(max(k, 1), _LANE)          # K padded only to the lane width
    row_tiled = m >= _ROW_TILED_MIN_M
    if row_tiled:
        tm = _TILE_M
        mp = _round_up(m, tm)                 # lane-dense G columns, 128-aligned
    else:
        sublane = 8 if itemsize >= 4 else (16 if itemsize == 2 else 32)
        tm = mp = _round_up(max(m, 1), sublane)   # sublane padding only
    # f32 bytes resident across the whole K loop for one Gram row block:
    # acc scratch + double-buffered G output tile + target-Gram DMA buffer.
    resident = 4 * tm * mp * 4
    # Bytes streamed per K column (double-buffered feature tiles; the
    # row-tiled path streams the (tm, tk) LHS rows and the full (mp, tk) RHS).
    stream = 2 * (tm + (mp if row_tiled else 0)) * itemsize
    avail = max(plan_bytes - resident, stream * _LANE)
    tk_cand = max(_LANE, (avail // stream) // _LANE * _LANE)
    # Largest multiple of 128 that divides kp -> no K padding beyond 128 and
    # the grid covers kp exactly.
    n128 = kp // _LANE
    d = max(1, min(tk_cand // _LANE, n128))
    while n128 % d:
        d -= 1
    tk = d * _LANE
    # TODO(synk): for extreme M (resident ~ plan_bytes) the Gram columns should
    # also be tiled; the planner currently degrades to tk=128 instead.
    return mp, kp, tm, tk, row_tiled, limit_bytes


def _feature_matrix(x, mp, kp, mxu_dtype):
    """(N,C,H,W) -> zero-padded (mp, kp) feature matrix in the MXU dtype."""
    a, b, c, d = x.shape
    m, k = a * b, c * d
    f = x.reshape(m, k)
    if f.dtype != mxu_dtype:
        f = f.astype(mxu_dtype)
    if (mp, kp) != (m, k):        # only sublane / 128-lane rounding; often a no-op
        f = jnp.pad(f, ((0, mp - m), (0, kp - k)))
    return f


# ----------------------------- Pallas kernels -----------------------------

def _accumulate(acc_ref, lhs, rhs):
    # Gram contribution of this K tile: contract the shared K axis (no
    # transpose materialized); f32 accumulation on the MXU.
    acc_ref[...] += lax.dot_general(
        lhs, rhs, dimension_numbers=(((1,), (1,)), ((), ())),
        preferred_element_type=jnp.float32)


def _gram_small_kernel(f_ref, g_ref, acc_ref, *, inv_denom):
    k = pl.program_id(0)

    @pl.when(k == 0)
    def _():
        acc_ref[...] = jnp.zeros_like(acc_ref)

    _accumulate(acc_ref, f_ref[...], f_ref[...])

    @pl.when(k == pl.num_programs(0) - 1)
    def _():
        g_ref[...] = (acc_ref[...] * inv_denom).astype(g_ref.dtype)


def _gram_tiled_kernel(lhs_ref, rhs_ref, g_ref, acc_ref, *, inv_denom):
    k = pl.program_id(1)

    @pl.when(k == 0)
    def _():
        acc_ref[...] = jnp.zeros_like(acc_ref)

    _accumulate(acc_ref, lhs_ref[...], rhs_ref[...])

    @pl.when(k == pl.num_programs(1) - 1)
    def _():
        g_ref[...] = (acc_ref[...] * inv_denom).astype(g_ref.dtype)


def _style_small_kernel(f_ref, tgt_hbm, g_ref, loss_ref, acc_ref, tgt_buf,
                        tgt_sem, *, inv_denom, inv_count):
    k = pl.program_id(0)

    @pl.when(k == 0)
    def _():
        acc_ref[...] = jnp.zeros_like(acc_ref)
        # The target Gram is only needed at the final step: keep it in HBM
        # (no resident double buffer) and overlap one DMA with the K loop.
        pltpu.make_async_copy(tgt_hbm, tgt_buf, tgt_sem).start()

    _accumulate(acc_ref, f_ref[...], f_ref[...])

    @pl.when(k == pl.num_programs(0) - 1)
    def _():
        pltpu.make_async_copy(tgt_hbm, tgt_buf, tgt_sem).wait()
        g = acc_ref[...] * inv_denom
        g_ref[...] = g.astype(g_ref.dtype)
        diff = g - tgt_buf[...]
        # Padded rows/cols are zero in both G and the target, so summing over
        # the padded block and dividing by the true M*M is exact.
        loss_ref[0, 0] = jnp.sum(diff * diff) * inv_count


def _style_tiled_kernel(lhs_ref, rhs_ref, tgt_hbm, g_ref, ploss_ref, acc_ref,
                        tgt_buf, tgt_sem, *, tm, inv_denom, inv_count):
    i = pl.program_id(0)
    k = pl.program_id(1)
    row0 = pl.multiple_of(i * tm, tm)

    @pl.when(k == 0)
    def _():
        acc_ref[...] = jnp.zeros_like(acc_ref)
        pltpu.make_async_copy(tgt_hbm.at[pl.ds(row0, tm), :],
                              tgt_buf, tgt_sem).start()

    _accumulate(acc_ref, lhs_ref[...], rhs_ref[...])

    @pl.when(k == pl.num_programs(1) - 1)
    def _():
        pltpu.make_async_copy(tgt_hbm.at[pl.ds(row0, tm), :],
                              tgt_buf, tgt_sem).wait()
        g = acc_ref[...] * inv_denom
        g_ref[...] = g.astype(g_ref.dtype)
        diff = g - tgt_buf[...]
        ploss_ref[0, 0] = jnp.sum(diff * diff) * inv_count


# ------------------------------ JAX wrappers -------------------------------

def gram_matrix(x):
    """Pallas equivalent of the PyTorch gram_matrix helper. Returns (N*C, N*C) f32."""
    a, b, c, d = x.shape
    m, k = a * b, c * d
    inv_denom = 1.0 / float(a * b * c * d)
    mxu_dtype = _mxu_dtype(x.dtype)
    itemsize = jnp.dtype(mxu_dtype).itemsize
    mp, kp, tm, tk, row_tiled, vmem_limit = _plan_tiles(m, k, itemsize)
    f = _feature_matrix(x, mp, kp, mxu_dtype)
    nk = kp // tk

    if not row_tiled:
        g = pl.pallas_call(
            functools.partial(_gram_small_kernel, inv_denom=inv_denom),
            out_shape=jax.ShapeDtypeStruct((mp, mp), jnp.float32),
            grid_spec=pltpu.PrefetchScalarGridSpec(
                num_scalar_prefetch=0,
                grid=(nk,),
                in_specs=[pl.BlockSpec((mp, tk), lambda kk: (0, kk))],
                out_specs=pl.BlockSpec((mp, mp), lambda kk: (0, 0)),
                scratch_shapes=[pltpu.VMEM((mp, mp), jnp.float32)],
            ),
            compiler_params=pltpu.CompilerParams(
                dimension_semantics=("arbitrary",),
                vmem_limit_bytes=vmem_limit),
            cost_estimate=pl.CostEstimate(
                flops=2 * mp * mp * kp,
                bytes_accessed=mp * kp * itemsize + mp * mp * 4,
                transcendentals=0),
        )(f)
    else:
        nrows = mp // tm
        g = pl.pallas_call(
            functools.partial(_gram_tiled_kernel, inv_denom=inv_denom),
            out_shape=jax.ShapeDtypeStruct((mp, mp), jnp.float32),
            grid_spec=pltpu.PrefetchScalarGridSpec(
                num_scalar_prefetch=0,
                grid=(nrows, nk),
                in_specs=[pl.BlockSpec((tm, tk), lambda i, kk: (i, kk)),
                          pl.BlockSpec((mp, tk), lambda i, kk: (0, kk))],
                out_specs=pl.BlockSpec((tm, mp), lambda i, kk: (i, 0)),
                scratch_shapes=[pltpu.VMEM((tm, mp), jnp.float32)],
            ),
            compiler_params=pltpu.CompilerParams(
                dimension_semantics=("parallel", "arbitrary"),
                vmem_limit_bytes=vmem_limit),
            cost_estimate=pl.CostEstimate(
                flops=2 * mp * mp * kp,
                bytes_accessed=(1 + nrows) * mp * kp * itemsize + mp * mp * 4,
                transcendentals=0),
        )(f, f)
    return g[:m, :m]


def _style_loss_impl(x, target_gram):
    """Returns (mse_loss(gram(x), target), gram(x)) with one fused kernel."""
    a, b, c, d = x.shape
    m, k = a * b, c * d
    inv_denom = 1.0 / float(a * b * c * d)
    inv_count = 1.0 / float(m * m)
    mxu_dtype = _mxu_dtype(x.dtype)
    itemsize = jnp.dtype(mxu_dtype).itemsize
    mp, kp, tm, tk, row_tiled, vmem_limit = _plan_tiles(m, k, itemsize)
    f = _feature_matrix(x, mp, kp, mxu_dtype)
    nk = kp // tk

    tgt = target_gram.astype(jnp.float32)
    if mp != m:
        tgt = jnp.pad(tgt, ((0, mp - m), (0, mp - m)))

    if not row_tiled:
        g, loss = pl.pallas_call(
            functools.partial(_style_small_kernel,
                              inv_denom=inv_denom, inv_count=inv_count),
            out_shape=(jax.ShapeDtypeStruct((mp, mp), jnp.float32),
                       jax.ShapeDtypeStruct((1, 1), jnp.float32)),
            grid_spec=pltpu.PrefetchScalarGridSpec(
                num_scalar_prefetch=0,
                grid=(nk,),
                in_specs=[pl.BlockSpec((mp, tk), lambda kk: (0, kk)),
                          pl.BlockSpec(memory_space=pl.ANY)],
                out_specs=(pl.BlockSpec((mp, mp), lambda kk: (0, 0)),
                           pl.BlockSpec((1, 1), lambda kk: (0, 0),
                                        memory_space=pltpu.SMEM)),
                scratch_shapes=[pltpu.VMEM((mp, mp), jnp.float32),   # Gram acc
                                pltpu.VMEM((mp, mp), jnp.float32),   # target buf
                                pltpu.SemaphoreType.DMA(())],
            ),
            compiler_params=pltpu.CompilerParams(
                dimension_semantics=("arbitrary",),
                vmem_limit_bytes=vmem_limit),
            cost_estimate=pl.CostEstimate(
                flops=2 * mp * mp * kp,
                bytes_accessed=mp * kp * itemsize + 2 * mp * mp * 4 + 4,
                transcendentals=0),
        )(f, tgt)
        total = loss[0, 0]
    else:
        nrows = mp // tm
        g, ploss = pl.pallas_call(
            functools.partial(_style_tiled_kernel, tm=tm,
                              inv_denom=inv_denom, inv_count=inv_count),
            out_shape=(jax.ShapeDtypeStruct((mp, mp), jnp.float32),
                       jax.ShapeDtypeStruct((nrows, 1), jnp.float32)),
            grid_spec=pltpu.PrefetchScalarGridSpec(
                num_scalar_prefetch=0,
                grid=(nrows, nk),
                in_specs=[pl.BlockSpec((tm, tk), lambda i, kk: (i, kk)),
                          pl.BlockSpec((mp, tk), lambda i, kk: (0, kk)),
                          pl.BlockSpec(memory_space=pl.ANY)],
                out_specs=(pl.BlockSpec((tm, mp), lambda i, kk: (i, 0)),
                           pl.BlockSpec((1, 1), lambda i, kk: (i, 0),
                                        memory_space=pltpu.SMEM)),
                scratch_shapes=[pltpu.VMEM((tm, mp), jnp.float32),   # Gram acc
                                pltpu.VMEM((tm, mp), jnp.float32),   # target rows
                                pltpu.SemaphoreType.DMA(())],
            ),
            compiler_params=pltpu.CompilerParams(
                dimension_semantics=("parallel", "arbitrary"),
                vmem_limit_bytes=vmem_limit),
            cost_estimate=pl.CostEstimate(
                flops=2 * mp * mp * kp,
                bytes_accessed=(1 + nrows) * mp * kp * itemsize
                               + 2 * mp * mp * 4 + nrows * 4,
                transcendentals=0),
        )(f, f, tgt)
        total = jnp.sum(ploss)          # tiny (nrows elements)
    return total, g[:m, :m]


@jax.custom_vjp
def style_loss(x, target_gram):
    """mse_loss(gram_matrix(x), target_gram), fused in one Pallas kernel."""
    loss, _ = _style_loss_impl(x, target_gram)
    return loss


def _style_loss_fwd(x, target_gram):
    loss, gram = _style_loss_impl(x, target_gram)
    # Save the forward Gram: backward does NOT recompute the big matmul.
    return loss, (x, target_gram, gram)


def _style_loss_bwd(res, g):
    x, target, gram = res
    a, b, c, d = x.shape
    m, k = a * b, c * d
    denom = float(a * b * c * d)
    dG = (2.0 / float(m * m)) * (gram - target.astype(jnp.float32)) * g
    f = x.reshape(m, k)
    if f.dtype == jnp.float32:
        f = f.astype(jnp.bfloat16)           # match the forward's MXU operands
    df = jnp.dot(dG + dG.T, f, preferred_element_type=jnp.float32) / denom
    dx = df.reshape(x.shape).astype(x.dtype)
    dtarget = (-dG).astype(target.dtype)
    return dx, dtarget


style_loss.defvjp(_style_loss_fwd, _style_loss_bwd)


class StyleLoss:
    """Mirrors the PyTorch StyleLoss module: stores the detached target Gram;
    __call__ computes self.loss = mse(gram(x), target) and returns x unchanged."""

    def __init__(self, target_feature):
        self.target = lax.stop_gradient(gram_matrix(target_feature))

    def __call__(self, x):
        # TODO(synk): self.loss as a Python attribute mirrors the PyTorch module
        # but is a host-side side effect; under jax.jit use style_loss() directly.
        self.loss = style_loss(x, self.target)
        return x


# ----------------------------------- main ----------------------------------

if __name__ == "__main__":
    def gram_ref(t):
        # Pure-JAX reference using the same bf16 MXU operands / f32 accumulation.
        a, b, c, d = t.shape
        fm = t.reshape(a * b, c * d).astype(jnp.bfloat16)
        return jnp.dot(fm, fm.T, preferred_element_type=jnp.float32) / (a * b * c * d)

    key = jax.random.PRNGKey(0)
    k0, k1, k2, k3 = jax.random.split(key, 4)

    # --- Small case: NCHW=(2,4,16,16) -> M=8, K=256 (single-TC K-loop path) --
    target_feature = jax.random.normal(k0, (2, 4, 16, 16), dtype=jnp.float32)
    x = jax.random.normal(k1, (2, 4, 16, 16), dtype=jnp.float32)

    module = StyleLoss(target_feature)
    out = module(x)
    loss = module.loss
    jax.block_until_ready(out)
    jax.block_until_ready(loss)

    ref_target = gram_ref(target_feature)
    assert jnp.allclose(module.target, ref_target, rtol=1e-4, atol=1e-6)
    ref_loss = jnp.mean((gram_ref(x) - ref_target) ** 2)
    assert jnp.allclose(loss, ref_loss, rtol=1e-3, atol=1e-7), (loss, ref_loss)
    assert jnp.array_equal(out, x)          # forward returns the input unchanged

    # Gradients through the custom_vjp (backward reuses the forward Gram).
    g_pallas = jax.grad(lambda t: style_loss(t, module.target))(x)
    g_ref = jax.grad(lambda t: jnp.mean((gram_ref(t) - module.target) ** 2))(x)
    jax.block_until_ready(g_pallas)
    assert jnp.allclose(g_pallas, g_ref, rtol=3e-2, atol=1e-8), "grad mismatch"

    # --- Larger case: NCHW=(1,256,32,32) -> M=256 (row-tiled 2-D grid path) --
    target_feature2 = jax.random.normal(k2, (1, 256, 32, 32), dtype=jnp.float32)
    x2 = jax.random.normal(k3, (1, 256, 32, 32), dtype=jnp.float32)
    module2 = StyleLoss(target_feature2)
    _ = module2(x2)
    loss2 = module2.loss
    jax.block_until_ready(loss2)

    ref_target2 = gram_ref(target_feature2)
    assert jnp.allclose(module2.target, ref_target2, rtol=1e-4, atol=1e-6)
    ref_loss2 = jnp.mean((gram_ref(x2) - ref_target2) ** 2)
    assert jnp.allclose(loss2, ref_loss2, rtol=1e-3, atol=1e-10), (loss2, ref_loss2)

    print("KERNEL_OK")
</pallas_src>

<mosaic_0001>
module attributes {stable_mosaic.version = 11 : i64} {
  func.func @_gram_small_kernel(%arg0: i32, %arg1: memref<16x256xbf16, #tpu.memory_space<vmem>>, %arg2: memref<16x16xf32, #tpu.memory_space<vmem>>, %arg3: memref<16x16xf32, #tpu.memory_space<vmem>>) attributes {dimension_semantics = [#tpu.dimension_semantics<arbitrary>], iteration_bounds = array<i64: 1>, scalar_prefetch = 0 : i64, scratch_operands = 1 : i64, tpu.core_type = #tpu.core_type<tc>, window_params = [{transform_indices = @transform_0, window_bounds = array<i64: 16, 256>}, {pipeline_mode = #tpu.pipeline_mode<synchronous>, transform_indices = @transform_1, window_bounds = array<i64: 16, 16>}]} {
    %c0_i32 = arith.constant 0 : i32
    %0 = arith.cmpi eq, %arg0, %c0_i32 : i32
    %1 = arith.extui %0 : i1 to i32
    %c0_i32_0 = arith.constant 0 : i32
    %2 = arith.cmpi ne, %1, %c0_i32_0 : i32
    scf.if %2 {
      %cst_10 = arith.constant 0.000000e+00 : f32
      %12 = vector.broadcast %cst_10 : f32 to vector<16x16xf32>
      %c0_11 = arith.constant 0 : index
      %c0_12 = arith.constant 0 : index
      %13 = vector.load %arg3[%c0_11, %c0_12] : memref<16x16xf32, #tpu.memory_space<vmem>>, vector<16x16xf32>
      tpu.vector_store %arg3[%c0_11, %c0_12], %12 {strides = array<i32>} : memref<16x16xf32, #tpu.memory_space<vmem>>, vector<16x16xf32>,
    } else {
    }
    %c0 = arith.constant 0 : index
    %c0_1 = arith.constant 0 : index
    %3 = vector.load %arg1[%c0, %c0_1] : memref<16x256xbf16, #tpu.memory_space<vmem>>, vector<16x256xbf16>
    %c0_2 = arith.constant 0 : index
    %c0_3 = arith.constant 0 : index
    %4 = vector.load %arg1[%c0_2, %c0_3] : memref<16x256xbf16, #tpu.memory_space<vmem>>, vector<16x256xbf16>
    %c0_4 = arith.constant 0 : index
    %c0_5 = arith.constant 0 : index
    %5 = vector.load %arg3[%c0_4, %c0_5] : memref<16x16xf32, #tpu.memory_space<vmem>>, vector<16x16xf32>
    %cst = arith.constant dense<0.000000e+00> : vector<16x16xf32>
    %6 = tpu.matmul %3, %4, %cst {dimension_numbers = #tpu.dot_dimension_numbers<[1], [1], [0], [0], [0, 0, 1, 0], [], []>} : vector<16x256xbf16>, vector<16x256xbf16>, vector<16x16xf32> -> vector<16x16xf32>
    %7 = arith.addf %5, %6 : vector<16x16xf32>
    %c0_6 = arith.constant 0 : index
    %c0_7 = arith.constant 0 : index
    %8 = vector.load %arg3[%c0_6, %c0_7] : memref<16x16xf32, #tpu.memory_space<vmem>>, vector<16x16xf32>
    tpu.vector_store %arg3[%c0_6, %c0_7], %7 {strides = array<i32>} : memref<16x16xf32, #tpu.memory_space<vmem>>, vector<16x16xf32>,
    %c0_i32_8 = arith.constant 0 : i32
    %9 = arith.cmpi eq, %arg0, %c0_i32_8 : i32
    %10 = arith.extui %9 : i1 to i32
    %c0_i32_9 = arith.constant 0 : i32
    %11 = arith.cmpi ne, %10, %c0_i32_9 : i32
    scf.if %11 {
      %c0_10 = arith.constant 0 : index
      %c0_11 = arith.constant 0 : index
      %12 = vector.load %arg3[%c0_10, %c0_11] : memref<16x16xf32, #tpu.memory_space<vmem>>, vector<16x16xf32>
      %cst_12 = arith.constant 4.8828125E-4 : f32
      %13 = vector.broadcast %cst_12 : f32 to vector<16x16xf32>
      %14 = arith.mulf %12, %13 : vector<16x16xf32>
      %c0_13 = arith.constant 0 : index
      %c0_14 = arith.constant 0 : index
      %15 = vector.load %arg2[%c0_13, %c0_14] : memref<16x16xf32, #tpu.memory_space<vmem>>, vector<16x16xf32>
      tpu.vector_store %arg2[%c0_13, %c0_14], %14 {strides = array<i32>} : memref<16x16xf32, #tpu.memory_space<vmem>>, vector<16x16xf32>,
    } else {
    }
    return
  }
  func.func @transform_0(%arg0: i32) -> (i32, i32) {
    %c0_i32 = arith.constant 0 : i32
    %c0_i32_0 = arith.constant 0 : i32
    return %c0_i32, %arg0 : i32, i32
  }
  func.func @transform_1(%arg0: i32) -> (i32, i32) {
    %c0_i32 = arith.constant 0 : i32
    %c0_i32_0 = arith.constant 0 : i32
    %c0_i32_1 = arith.constant 0 : i32
    return %c0_i32, %c0_i32_0 : i32, i32
  }
}

</mosaic_0001>

<llo_original>
// kernel: tpu_custom_call.1
$region0: #{tpu_custom_call.1}
  #allocation0 [shape = 'u32[]', space=smem, size = 0x4, offset = 0x4, fixed_abs, tag = 'smem constant byte address 0x4 - core index']
  #allocation1 [shape = 'u32[144,128]{1,0:T(1,128)}', space=vmem, size = 0x12000, scoped, tag = 'internal scratch']
  #allocation2 [shape = 'f32[16,16]{1,0:T(8,128)}', space=vmem, size = 0x2000, scoped, tag = 'scratch operand']
  %s0 = inlined_call_operand.hbm [shape: bf16[16,256], index: 0, kind: input, shape index: {}]
  %s1 = inlined_call_operand.hbm [shape: f32[16,16], index: 1, kind: output, shape index: {}]
  %s2 = sld [smem:[#allocation0]]
  $region26: #{tpu_custom_call.1} parent=0
    _
  %s4 = ssub.s32 1, %s2
  %s5 = scalar_select 0, %s4, %s2
  $region1: #{tpu_custom_call.1} parent=0
    #allocation3 [shape = 'u8[8192]{0}', space=vmem, size = 0x2000, scoped, tag = 'input window, operand 0, single buffered']
    #allocation4 [shape = 's32[1]{0}', space=sflag, size = 0x4, scoped, tag = 'scoped memory for tpu_custom_call.1']
    #allocation5 [shape = 's32[1]{0}', space=sflag, size = 0x4, scoped, tag = 'scoped memory for tpu_custom_call.1']
    #allocation6 [shape = 'u8[8192]{0}', space=vmem, size = 0x2000, scoped, tag = 'output window, operand 0, single buffered']
    %6 = vsyncpa [#allocation4], 0
    %7 = vsyncpa [#allocation5], 0
    // Predicated region
    $region2: #{tpu_custom_call.1} parent=1 // pred_check
      _
    $region3: #{tpu_custom_call.1} parent=1 // pred_check_branch
      %9 = sbr.rel (0) target = $region5
    $region4: #{tpu_custom_call.1} parent=1 // pred_region
      %s11 = ssub.s32 256, 256
      %12 = vsyncadd [#allocation4], %s11
      %s13 = sshll.u32 [#allocation3], 4
      %s14 = int_to_ptr.vmem [resolvable:$true] %s13
      %19 = dma.hbm_to_vmem [thread:$0]  %s0, 256, %s14, [#allocation4], 128, 128, 8
    $region5: #{tpu_custom_call.1} parent=1 // pred_fallthru
      _
    // Predicated region
    $region6: #{tpu_custom_call.1} parent=1 // pred_check
      _
    $region7: #{tpu_custom_call.1} parent=1 // pred_check_branch
      %21 = sbr.rel (0) target = $region9
    $region8: #{tpu_custom_call.1} parent=1 // pred_region
      %22 = dma.done [#allocation4], 256
    $region9: #{tpu_custom_call.1} parent=1 // pred_fallthru
      _
    %p24 = scmp.eq.s32.totalorder 0, 0
    // Predicated region
    $region10: #{tpu_custom_call.1} parent=1 // pred_check
      %p25 = pneg %p24
    $region11: #{tpu_custom_call.1} parent=1 // pred_check_branch
      %27 = sbr.rel (%p25) target = $region13
    $region12: #{tpu_custom_call.1} parent=1 // pred_region
      %vm28 = vcmask 130048
      %29 = vst.msk [vmem:[#allocation2] sm:$0xff] %vm28, 0.0
      %30 = vst.msk [vmem:[#allocation2 + $0x8] sm:$0xff] %vm28, 0.0
    $region13: #{tpu_custom_call.1} parent=1 // pred_fallthru
      _
    %v31 = vld [vmem:[#allocation3] sm:$0xff]
    %v32 = vld [vmem:[#allocation3 + $0x8] sm:$0xff]
    %v33 = vld [vmem:[#allocation2] sm:$0xff]
    %v34 = vld [vmem:[#allocation2 + $0x8] sm:$0xff]
    %v37 = vunpack.c.l.b16 %v31
    %v38 = vunpack.c.h.b16 %v31
    %v39 = vunpack.c.l.b16 %v32
    %v40 = vunpack.c.h.b16 %v32
    %v41 = vpack.c.b16 %v39, %v37
    %v42 = vpack.c.b16 %v40, %v38
    %45 = vmatprep.subr.bf16.mxu0 %v42
    %46 = vmatpush1.bf16.xpose.msra.mxu0 %v41
    %47 = vmatprep.subr.bf16.mxu0 0
    %48 = vmatpush1.bf16.xpose.msra.mxu0 0
    %49 = vmatprep.subr.bf16.mxu0 0
    %50 = vmatpush1.bf16.xpose.msra.mxu0 0
    %51 = vmatprep.subr.bf16.mxu0 0
    %52 = vmatpush1.bf16.xpose.msra.mxu0 0
    %53 = vmatprep.subr.bf16.mxu0 0
    %54 = vmatpush1.bf16.xpose.msra.mxu0 0
    %55 = vmatprep.subr.bf16.mxu0 0
    %56 = vmatpush1.bf16.xpose.msra.mxu0 0
    %57 = vmatprep.subr.bf16.mxu0 0
    %58 = vmatpush1.bf16.xpose.msra.mxu0 0
    %59 = vmatprep.subr.bf16.mxu0 0
    %60 = vmatpush1.bf16.xpose.msra.mxu0 0
    %61 = vmatprep.subr.bf16.mxu0 0
    %62 = vmatpush1.bf16.xpose.msra.mxu0 0
    %63 = vmatprep.subr.bf16.mxu0 0
    %64 = vmatpush1.bf16.xpose.msra.mxu0 0
    %65 = vmatprep.subr.bf16.mxu0 0
    %66 = vmatpush1.bf16.xpose.msra.mxu0 0
    %67 = vmatprep.subr.bf16.mxu0 0
    %68 = vmatpush1.bf16.xpose.msra.mxu0 0
    %69 = vmatprep.subr.bf16.mxu0 0
    %70 = vmatpush1.bf16.xpose.msra.mxu0 0
    %71 = vmatprep.subr.bf16.mxu0 0
    %72 = vmatpush1.bf16.xpose.msra.mxu0 0
    %73 = vmatprep.subr.bf16.mxu0 0
    %74 = vmatpush1.bf16.xpose.msra.mxu0 0
    %75 = vmatprep.subr.bf16.mxu0 0
    %76 = vmatpush1.bf16.xpose.msra.mxu0 0
    %77 = vmatprep.mubr.bf16.mxu0 %v42
    %78 = vmatmul.mubr.bf16.gmra.mrb[0].mxu0 %v41
    %v79 = vpop.f32.mrb[0].mxu0
    %v80 = vadd.f32 0.0, %v79
    %v81 = vpop.f32.mrb[0].mxu0
    %v82 = vpop.f32.mrb[0].mxu0
    %v83 = vadd.f32 0.0, %v82
    %v84 = vpop.f32.mrb[0].mxu0
    %85 = vdwg.mxu0
    %v86 = vadd.f32 %v33, %v80
    %v87 = vadd.f32 %v34, %v83
    %vm88 = vcmask 130048
    %89 = vst.msk [vmem:[#allocation2] sm:$0xff] %vm88, %v86
    %90 = vst.msk [vmem:[#allocation2 + $0x8] sm:$0xff] %vm88, %v87
    // Predicated region
    $region14: #{tpu_custom_call.1} parent=1 // pred_check
      %p91 = pneg %p24
    $region15: #{tpu_custom_call.1} parent=1 // pred_check_branch
      %93 = sbr.rel (%p91) target = $region17
    $region16: #{tpu_custom_call.1} parent=1 // pred_region
      %v94 = vld [vmem:[#allocation2] sm:$0xff]
      %v95 = vld [vmem:[#allocation2 + $0x8] sm:$0xff]
      %v96 = vmul.f32 %v94, 0.00048828125
      %v97 = vmul.f32 %v95, 0.00048828125
      %98 = vst.msk [vmem:[#allocation6] sm:$0xff] %vm88, %v96
      %99 = vst.msk [vmem:[#allocation6 + $0x8] sm:$0xff] %vm88, %v97
    $region17: #{tpu_custom_call.1} parent=1 // pred_fallthru
      _
    // Predicated region
    $region18: #{tpu_custom_call.1} parent=1 // pred_check
      _
    $region19: #{tpu_custom_call.1} parent=1 // pred_check_branch
      %101 = sbr.rel (0) target = $region21
    $region20: #{tpu_custom_call.1} parent=1 // pred_region
      %s103 = ssub.s32 256, 256
      %104 = vsyncadd [#allocation5], %s103
      %s105 = sshll.u32 [#allocation6], 4
      %s106 = int_to_ptr.vmem [resolvable:$true] %s105
      %111 = dma.vmem_to_hbm [thread:$0]  %s106, 256, %s1, [#allocation5], 128, 128, 8
    $region21: #{tpu_custom_call.1} parent=1 // pred_fallthru
      _
    // Predicated region
    $region22: #{tpu_custom_call.1} parent=1 // pred_check
      _
    $region23: #{tpu_custom_call.1} parent=1 // pred_check_branch
      %113 = sbr.rel (0) target = $region25
    $region24: #{tpu_custom_call.1} parent=1 // pred_region
      %114 = dma.done [#allocation5], 256
    $region25: #{tpu_custom_call.1} parent=1 // pred_fallthru
      _
    %115 = vsyncpa [#allocation4], 1
    %116 = vsyncpa [#allocation5], 1

</llo_original>
